<compile_context>
chip_gen: v5e
topology: v5e:2x2
jax: 0.10.0
libtpu: 0.0.40
codegen_flags: <defaults>
</compile_context>

<pallas_src>
import functools
import math

import jax
import jax.numpy as jnp
from jax.experimental import pallas as pl
from jax.experimental.pallas import tpu as pltpu


# 48 MiB: leaves headroom inside v7x's 64 MiB VMEM, well under v5e/v6e's 128 MiB.
_VMEM_LIMIT_BYTES = 48 * 1024 * 1024


def _round_up(x, m):
    return (x + m - 1) // m * m


def _choose_tiles(n, tn_target, tk_target):
    """Pick (tn, tk, padded_n) with padded_n % tn == padded_n % tk == 0 and
    tile dims satisfying the (8, 128) block constraints (tk is a multiple of
    128 or the full padded extent)."""
    tn = min(tn_target, _round_up(n, 8))
    if n <= tk_target:
        np_ = _round_up(n, tn)
        tk = np_                      # single contraction block == full extent
    else:
        tk = tk_target                # multiple of 128 by construction
        step = tn * tk // math.gcd(tn, tk)
        np_ = _round_up(n, step)
    return tn, tk, np_


# --------------------------------------------------------------------------
# Kernels
# --------------------------------------------------------------------------
def _sage_fused_kernel(adj_ref, x_ref, xself_ref, inv_ref, w_ref, b_ref,
                       out_ref, acc_ref, *, apply_relu):
    """Aggregate-then-transform SAGEConv('gcn') for one (row, k) grid step.

    acc += adj_tile @ x_tile           (K-tiled GCN neighbor sum, f32 acc)
    at k == last:
      out = relu?( ((acc + x_self) * inv_deg) @ W + b )
    """
    k = pl.program_id(1)

    @pl.when(k == 0)
    def _init():
        acc_ref[...] = jnp.zeros_like(acc_ref)

    acc_ref[...] += jnp.dot(adj_ref[...], x_ref[...],
                            preferred_element_type=jnp.float32)

    @pl.when(k == pl.num_programs(1) - 1)
    def _finish():
        agg = (acc_ref[...] + xself_ref[...].astype(jnp.float32)) * inv_ref[...]
        out = jnp.dot(agg, w_ref[...].astype(jnp.float32),
                      preferred_element_type=jnp.float32) + b_ref[...]
        if apply_relu:
            out = jnp.maximum(out, 0.0)
        out_ref[...] = out.astype(out_ref.dtype)


def _sage_aggregate_kernel(adj_ref, x_ref, xself_ref, inv_ref, b_ref,
                           out_ref, acc_ref, *, apply_relu):
    """Transform-then-aggregate epilogue: x is already h @ W.

    out = relu?( (adj @ x + x_self) * inv_deg + b )
    """
    k = pl.program_id(1)

    @pl.when(k == 0)
    def _init():
        acc_ref[...] = jnp.zeros_like(acc_ref)

    acc_ref[...] += jnp.dot(adj_ref[...], x_ref[...],
                            preferred_element_type=jnp.float32)

    @pl.when(k == pl.num_programs(1) - 1)
    def _finish():
        out = (acc_ref[...] + xself_ref[...].astype(jnp.float32)) * inv_ref[...] \
              + b_ref[...]
        if apply_relu:
            out = jnp.maximum(out, 0.0)
        out_ref[...] = out.astype(out_ref.dtype)


def _linear_kernel(x_ref, w_ref, out_ref):
    """Row-tiled per-node transform: out = x @ W (used for transform-first)."""
    out_ref[...] = jnp.dot(x_ref[...].astype(jnp.float32), w_ref[...],
                           preferred_element_type=jnp.float32).astype(out_ref.dtype)


# --------------------------------------------------------------------------
# pallas_call wrappers
# --------------------------------------------------------------------------
def _sage_fused_layer(adj, x, inv, w, b, *, apply_relu, tn, tk):
    np_ = adj.shape[0]
    f_in, f_out = w.shape
    grid = (np_ // tn, np_ // tk)
    flops = 2 * np_ * np_ * f_in + 2 * np_ * f_in * f_out
    bytes_accessed = (adj.size * adj.dtype.itemsize
                      + grid[0] * np_ * f_in * x.dtype.itemsize   # streamed x per row block
                      + np_ * f_in * x.dtype.itemsize             # x_self
                      + np_ * 4 + f_in * f_out * 4 + np_ * f_out * 4)
    return pl.pallas_call(
        functools.partial(_sage_fused_kernel, apply_relu=apply_relu),
        out_shape=jax.ShapeDtypeStruct((np_, f_out), jnp.float32),
        grid_spec=pltpu.PrefetchScalarGridSpec(
            num_scalar_prefetch=0,
            grid=grid,
            in_specs=[
                pl.BlockSpec((tn, tk), lambda i, k: (i, k)),        # adjacency tile
                pl.BlockSpec((tk, f_in), lambda i, k: (k, 0)),      # streamed neighbor feats
                pl.BlockSpec((tn, f_in), lambda i, k: (i, 0)),      # self feats (row tile)
                pl.BlockSpec((tn, 1), lambda i, k: (i, 0)),         # 1/(deg+1)
                pl.BlockSpec((f_in, f_out), lambda i, k: (0, 0)),   # fc_neigh weight (in,out)
                pl.BlockSpec((1, f_out), lambda i, k: (0, 0)),      # fc_neigh bias
            ],
            out_specs=pl.BlockSpec((tn, f_out), lambda i, k: (i, 0)),
            scratch_shapes=[pltpu.VMEM((tn, f_in), jnp.float32)],
        ),
        compiler_params=pltpu.CompilerParams(
            dimension_semantics=("parallel", "arbitrary"),
            vmem_limit_bytes=_VMEM_LIMIT_BYTES,
        ),
        cost_estimate=pl.CostEstimate(flops=int(flops), transcendentals=0,
                                      bytes_accessed=int(bytes_accessed)),
    )(adj, x, x, inv, w, b)


def _sage_aggregate_layer(adj, x, inv, b, *, apply_relu, tn, tk):
    np_ = adj.shape[0]
    f_out = x.shape[1]
    grid = (np_ // tn, np_ // tk)
    flops = 2 * np_ * np_ * f_out
    bytes_accessed = (adj.size * adj.dtype.itemsize
                      + grid[0] * np_ * f_out * x.dtype.itemsize
                      + np_ * f_out * x.dtype.itemsize
                      + np_ * 4 + f_out * 4 + np_ * f_out * 4)
    return pl.pallas_call(
        functools.partial(_sage_aggregate_kernel, apply_relu=apply_relu),
        out_shape=jax.ShapeDtypeStruct((np_, f_out), jnp.float32),
        grid_spec=pltpu.PrefetchScalarGridSpec(
            num_scalar_prefetch=0,
            grid=grid,
            in_specs=[
                pl.BlockSpec((tn, tk), lambda i, k: (i, k)),      # adjacency tile
                pl.BlockSpec((tk, f_out), lambda i, k: (k, 0)),   # streamed h@W
                pl.BlockSpec((tn, f_out), lambda i, k: (i, 0)),   # (h@W)_self
                pl.BlockSpec((tn, 1), lambda i, k: (i, 0)),       # 1/(deg+1)
                pl.BlockSpec((1, f_out), lambda i, k: (0, 0)),    # fc_neigh bias
            ],
            out_specs=pl.BlockSpec((tn, f_out), lambda i, k: (i, 0)),
            scratch_shapes=[pltpu.VMEM((tn, f_out), jnp.float32)],
        ),
        compiler_params=pltpu.CompilerParams(
            dimension_semantics=("parallel", "arbitrary"),
            vmem_limit_bytes=_VMEM_LIMIT_BYTES,
        ),
        cost_estimate=pl.CostEstimate(flops=int(flops), transcendentals=0,
                                      bytes_accessed=int(bytes_accessed)),
    )(adj, x, x, inv, b)


def _linear_layer(x, w, *, tn, out_dtype):
    np_, f_in = x.shape
    f_out = w.shape[1]
    return pl.pallas_call(
        _linear_kernel,
        out_shape=jax.ShapeDtypeStruct((np_, f_out), out_dtype),
        grid_spec=pltpu.PrefetchScalarGridSpec(
            num_scalar_prefetch=0,
            grid=(np_ // tn,),
            in_specs=[
                pl.BlockSpec((tn, f_in), lambda i: (i, 0)),
                pl.BlockSpec((f_in, f_out), lambda i: (0, 0)),
            ],
            out_specs=pl.BlockSpec((tn, f_out), lambda i: (i, 0)),
        ),
        compiler_params=pltpu.CompilerParams(
            dimension_semantics=("parallel",),
            vmem_limit_bytes=_VMEM_LIMIT_BYTES,
        ),
    )(x, w)


# --------------------------------------------------------------------------
# Full SAGE forward
# --------------------------------------------------------------------------
def sage_forward(adj, feats, params, *, compute_dtype=jnp.float32,
                 tn_target=256, tk_target=512):
    """params: list of (W_in_out, bias) per layer. Returns (h_list, h)."""
    n = adj.shape[0]
    num_layers = len(params)
    tn, tk, np_ = _choose_tiles(n, tn_target, tk_target)

    # Layer-invariant precompute, done ONCE per forward (not per layer).
    deg = jnp.sum(adj.astype(jnp.float32), axis=1, keepdims=True)
    inv = 1.0 / (deg + 1.0)

    pad = np_ - n
    if pad:
        adj = jnp.pad(adj, ((0, pad), (0, pad)))       # padded cols are 0 -> no effect
        feats = jnp.pad(feats, ((0, pad), (0, 0)))
        inv = jnp.pad(inv, ((0, pad), (0, 0)), constant_values=1.0)

    # 0/1 adjacency is exact in bf16; narrowing halves its HBM/DMA bytes.
    adj_c = adj.astype(compute_dtype)

    h = feats.astype(jnp.float32)
    h_list = []
    for l, (w, b) in enumerate(params):
        apply_relu = l != num_layers - 1
        f_in, f_out = w.shape
        x = h.astype(compute_dtype)
        if f_out < f_in:
            # Transform-then-aggregate (mathematically identical, fewer MXU flops
            # on the dominant N^2 matmul when the layer shrinks the feature dim).
            hw = _linear_layer(x, w, tn=tn, out_dtype=compute_dtype)
            h = _sage_aggregate_layer(adj_c, hw, inv, b,
                                      apply_relu=apply_relu, tn=tn, tk=tk)
        else:
            h = _sage_fused_layer(adj_c, x, inv, w, b,
                                  apply_relu=apply_relu, tn=tn, tk=tk)
        # TODO(synk): dropout is identity in eval mode; norm_type defaults to
        # 'none' (reference module never creates self.norms) -> both omitted.
        h_list.append(h)

    if pad:
        h_list = [t[:n] for t in h_list]
    return h_list, h_list[-1]


def sage_reference(adj, feats, params):
    """Pure-JAX mirror of SAGE.forward (eval mode) for correctness checking."""
    num_layers = len(params)
    deg = jnp.sum(adj, axis=1, keepdims=True)
    h = feats
    h_list = []
    for l, (w, b) in enumerate(params):
        h = ((adj @ h + h) / (deg + 1.0)) @ w + b
        if l != num_layers - 1:
            h = jax.nn.relu(h)
        h_list.append(h)
    return h_list, h


def init_params(key, num_layers, input_dim, hidden_dim, output_dim):
    """Per-layer (weight, bias); weight stored as (in, out) = torch W.T."""
    if num_layers == 1:
        dims = [(input_dim, output_dim)]
    else:
        dims = ([(input_dim, hidden_dim)]
                + [(hidden_dim, hidden_dim)] * (num_layers - 2)
                + [(hidden_dim, output_dim)])
    params = []
    for fi, fo in dims:
        key, kw, kb = jax.random.split(key, 3)
        bound = 1.0 / math.sqrt(fi)
        w = jax.random.uniform(kw, (fi, fo), jnp.float32, -bound, bound)
        b = jax.random.uniform(kb, (1, fo), jnp.float32, -bound, bound)
        params.append((w, b))
    return params


if __name__ == "__main__":
    key = jax.random.PRNGKey(0)

    def run_case(n, num_layers, input_dim, hidden_dim, output_dim,
                 tn_target, tk_target, case_key):
        kg, kf, kp = jax.random.split(case_key, 3)
        adj = (jax.random.uniform(kg, (n, n)) < 0.3).astype(jnp.float32)
        adj = adj * (1.0 - jnp.eye(n, dtype=jnp.float32))  # no explicit self loops
        feats = jax.random.normal(kf, (n, input_dim), jnp.float32)
        params = init_params(kp, num_layers, input_dim, hidden_dim, output_dim)

        # Exact f32 path.
        h_list, h = sage_forward(adj, feats, params, compute_dtype=jnp.float32,
                                 tn_target=tn_target, tk_target=tk_target)
        h = jax.block_until_ready(h)
        for t in h_list:
            jax.block_until_ready(t)

        h_list_ref, h_ref = sage_reference(adj, feats, params)
        assert h.shape == (n, output_dim), "output shape mismatch"
        for a, b in zip(h_list, h_list_ref):
            assert jnp.allclose(a, b, atol=1e-4, rtol=1e-4), "layer output mismatch"
        assert jnp.allclose(h, h_ref, atol=1e-4, rtol=1e-4), "final output mismatch"

        # bf16 fast path (narrowed adj/feature streams, f32 accumulation).
        _, h_bf16 = sage_forward(adj, feats, params, compute_dtype=jnp.bfloat16,
                                 tn_target=tn_target, tk_target=tk_target)
        h_bf16 = jax.block_until_ready(h_bf16)
        assert jnp.allclose(h_bf16.astype(jnp.float32), h_ref,
                            atol=5e-2, rtol=5e-2), "bf16 path mismatch"

    # 1) Small shapes consistent with the module: 16 nodes, 2 layers,
    #    input_dim=32, hidden_dim=32, output_dim=16, activation=relu.
    key, k1 = jax.random.split(key)
    run_case(16, 2, 32, 32, 16, 256, 512, k1)

    # 2) A case exercising K-tiled accumulation, row padding and the
    #    multi-block 'parallel' row grid (3 layers, 300 nodes, 128x128 tiles).
    key, k2 = jax.random.split(key)
    run_case(300, 3, 32, 32, 16, 128, 128, k2)

    print("KERNEL_OK")
</pallas_src>

<mosaic_0001>
module attributes {stable_mosaic.version = 11 : i64} {
  func.func @_sage_fused_kernel(%arg0: i32, %arg1: i32, %arg2: memref<16x16xf32, #tpu.memory_space<vmem>>, %arg3: memref<16x32xf32, #tpu.memory_space<vmem>>, %arg4: memref<16x32xf32, #tpu.memory_space<vmem>>, %arg5: memref<16x1xf32, #tpu.memory_space<vmem>>, %arg6: memref<32x32xf32, #tpu.memory_space<vmem>>, %arg7: memref<1x32xf32, #tpu.memory_space<vmem>>, %arg8: memref<16x32xf32, #tpu.memory_space<vmem>>, %arg9: memref<16x32xf32, #tpu.memory_space<vmem>>) attributes {dimension_semantics = [#tpu.dimension_semantics<parallel>, #tpu.dimension_semantics<arbitrary>], iteration_bounds = array<i64: 1, 1>, scalar_prefetch = 0 : i64, scratch_operands = 1 : i64, tpu.core_type = #tpu.core_type<tc>, window_params = [{transform_indices = @transform_0, window_bounds = array<i64: 16, 16>}, {transform_indices = @transform_1, window_bounds = array<i64: 16, 32>}, {transform_indices = @transform_2, window_bounds = array<i64: 16, 32>}, {transform_indices = @transform_3, window_bounds = array<i64: 16, 1>}, {pipeline_mode = #tpu.pipeline_mode<synchronous>, transform_indices = @transform_4, window_bounds = array<i64: 32, 32>}, {pipeline_mode = #tpu.pipeline_mode<synchronous>, transform_indices = @transform_5, window_bounds = array<i64: 1, 32>}, {transform_indices = @transform_6, window_bounds = array<i64: 16, 32>}]} {
    %c0_i32 = arith.constant 0 : i32
    %0 = arith.cmpi eq, %arg1, %c0_i32 : i32
    %1 = arith.extui %0 : i1 to i32
    %c0_i32_0 = arith.constant 0 : i32
    %2 = arith.cmpi ne, %1, %c0_i32_0 : i32
    scf.if %2 {
      %cst_10 = arith.constant 0.000000e+00 : f32
      %12 = vector.broadcast %cst_10 : f32 to vector<16x32xf32>
      %c0_11 = arith.constant 0 : index
      %c0_12 = arith.constant 0 : index
      %13 = vector.load %arg9[%c0_11, %c0_12] : memref<16x32xf32, #tpu.memory_space<vmem>>, vector<16x32xf32>
      tpu.vector_store %arg9[%c0_11, %c0_12], %12 {strides = array<i32>} : memref<16x32xf32, #tpu.memory_space<vmem>>, vector<16x32xf32>,
    } else {
    }
    %c0 = arith.constant 0 : index
    %c0_1 = arith.constant 0 : index
    %3 = vector.load %arg9[%c0, %c0_1] : memref<16x32xf32, #tpu.memory_space<vmem>>, vector<16x32xf32>
    %c0_2 = arith.constant 0 : index
    %c0_3 = arith.constant 0 : index
    %4 = vector.load %arg2[%c0_2, %c0_3] : memref<16x16xf32, #tpu.memory_space<vmem>>, vector<16x16xf32>
    %c0_4 = arith.constant 0 : index
    %c0_5 = arith.constant 0 : index
    %5 = vector.load %arg3[%c0_4, %c0_5] : memref<16x32xf32, #tpu.memory_space<vmem>>, vector<16x32xf32>
    %cst = arith.constant dense<0.000000e+00> : vector<16x32xf32>
    %6 = tpu.matmul %4, %5, %cst {dimension_numbers = #tpu.dot_dimension_numbers<[1], [0], [0], [1], [0, 0, 1, 1], [], []>} : vector<16x16xf32>, vector<16x32xf32>, vector<16x32xf32> -> vector<16x32xf32>
    %7 = arith.addf %3, %6 : vector<16x32xf32>
    %c0_6 = arith.constant 0 : index
    %c0_7 = arith.constant 0 : index
    %8 = vector.load %arg9[%c0_6, %c0_7] : memref<16x32xf32, #tpu.memory_space<vmem>>, vector<16x32xf32>
    tpu.vector_store %arg9[%c0_6, %c0_7], %7 {strides = array<i32>} : memref<16x32xf32, #tpu.memory_space<vmem>>, vector<16x32xf32>,
    %c0_i32_8 = arith.constant 0 : i32
    %9 = arith.cmpi eq, %arg1, %c0_i32_8 : i32
    %10 = arith.extui %9 : i1 to i32
    %c0_i32_9 = arith.constant 0 : i32
    %11 = arith.cmpi ne, %10, %c0_i32_9 : i32
    scf.if %11 {
      %c0_10 = arith.constant 0 : index
      %c0_11 = arith.constant 0 : index
      %12 = vector.load %arg9[%c0_10, %c0_11] : memref<16x32xf32, #tpu.memory_space<vmem>>, vector<16x32xf32>
      %c0_12 = arith.constant 0 : index
      %c0_13 = arith.constant 0 : index
      %13 = vector.load %arg4[%c0_12, %c0_13] : memref<16x32xf32, #tpu.memory_space<vmem>>, vector<16x32xf32>
      %14 = arith.addf %12, %13 : vector<16x32xf32>
      %c0_14 = arith.constant 0 : index
      %c0_15 = arith.constant 0 : index
      %15 = vector.load %arg5[%c0_14, %c0_15] : memref<16x1xf32, #tpu.memory_space<vmem>>, vector<16x1xf32>
      %16 = vector.broadcast %15 : vector<16x1xf32> to vector<16x32xf32>
      %17 = arith.mulf %14, %16 : vector<16x32xf32>
      %c0_16 = arith.constant 0 : index
      %c0_17 = arith.constant 0 : index
      %18 = vector.load %arg6[%c0_16, %c0_17] : memref<32x32xf32, #tpu.memory_space<vmem>>, vector<32x32xf32>
      %cst_18 = arith.constant dense<0.000000e+00> : vector<16x32xf32>
      %19 = tpu.matmul %17, %18, %cst_18 {dimension_numbers = #tpu.dot_dimension_numbers<[1], [0], [0], [1], [0, 0, 1, 1], [], []>} : vector<16x32xf32>, vector<32x32xf32>, vector<16x32xf32> -> vector<16x32xf32>
      %c0_19 = arith.constant 0 : index
      %c0_20 = arith.constant 0 : index
      %20 = vector.load %arg7[%c0_19, %c0_20] : memref<1x32xf32, #tpu.memory_space<vmem>>, vector<1x32xf32>
      %21 = vector.broadcast %20 : vector<1x32xf32> to vector<16x32xf32>
      %22 = arith.addf %19, %21 : vector<16x32xf32>
      %cst_21 = arith.constant 0.000000e+00 : f32
      %23 = vector.broadcast %cst_21 : f32 to vector<16x32xf32>
      %24 = arith.maximumf %22, %23 : vector<16x32xf32>
      %c0_22 = arith.constant 0 : index
      %c0_23 = arith.constant 0 : index
      %25 = vector.load %arg8[%c0_22, %c0_23] : memref<16x32xf32, #tpu.memory_space<vmem>>, vector<16x32xf32>
      tpu.vector_store %arg8[%c0_22, %c0_23], %24 {strides = array<i32>} : memref<16x32xf32, #tpu.memory_space<vmem>>, vector<16x32xf32>,
    } else {
    }
    return
  }
  func.func @transform_0(%arg0: i32, %arg1: i32) -> (i32, i32) {
    %c0_i32 = arith.constant 0 : i32
    return %arg0, %arg1 : i32, i32
  }
  func.func @transform_1(%arg0: i32, %arg1: i32) -> (i32, i32) {
    %c0_i32 = arith.constant 0 : i32
    %c0_i32_0 = arith.constant 0 : i32
    return %arg1, %c0_i32 : i32, i32
  }
  func.func @transform_2(%arg0: i32, %arg1: i32) -> (i32, i32) {
    %c0_i32 = arith.constant 0 : i32
    %c0_i32_0 = arith.constant 0 : i32
    return %arg0, %c0_i32 : i32, i32
  }
  func.func @transform_3(%arg0: i32, %arg1: i32) -> (i32, i32) {
    %c0_i32 = arith.constant 0 : i32
    %c0_i32_0 = arith.constant 0 : i32
    return %arg0, %c0_i32 : i32, i32
  }
  func.func @transform_4(%arg0: i32, %arg1: i32) -> (i32, i32) {
    %c0_i32 = arith.constant 0 : i32
    %c0_i32_0 = arith.constant 0 : i32
    %c0_i32_1 = arith.constant 0 : i32
    return %c0_i32, %c0_i32_0 : i32, i32
  }
  func.func @transform_5(%arg0: i32, %arg1: i32) -> (i32, i32) {
    %c0_i32 = arith.constant 0 : i32
    %c0_i32_0 = arith.constant 0 : i32
    %c0_i32_1 = arith.constant 0 : i32
    return %c0_i32, %c0_i32_0 : i32, i32
  }
  func.func @transform_6(%arg0: i32, %arg1: i32) -> (i32, i32) {
    %c0_i32 = arith.constant 0 : i32
    %c0_i32_0 = arith.constant 0 : i32
    return %arg0, %c0_i32 : i32, i32
  }
}

</mosaic_0001>

<llo_original>
// kernel: tpu_custom_call.1
$region0: #{tpu_custom_call.1}
  #allocation0 [shape = 'u32[]', space=smem, size = 0x4, offset = 0x4, fixed_abs, tag = 'smem constant byte address 0x4 - core index']
  #allocation1 [shape = 'u32[72,128]{1,0:T(1,128)}', space=vmem, size = 0x9000, scoped, tag = 'internal scratch']
  #allocation2 [shape = 'f32[16,32]{1,0:T(8,128)}', space=vmem, size = 0x2000, scoped, tag = 'scratch operand']
  %s0 = inlined_call_operand.vmem [shape: f32[16,16], index: 0, kind: input, shape index: {}]
  %s1 = inlined_call_operand.hbm [shape: f32[16,32], index: 1, kind: input, shape index: {}]
  %s2 = inlined_call_operand.hbm [shape: f32[16,32], index: 2, kind: input, shape index: {}]
  %s3 = inlined_call_operand.vmem [shape: f32[16,1], index: 3, kind: input, shape index: {}]
  %s4 = inlined_call_operand.hbm [shape: f32[32,32], index: 4, kind: input, shape index: {}]
  %s5 = inlined_call_operand.vmem [shape: f32[1,32], index: 5, kind: input, shape index: {}]
  %s6 = inlined_call_operand.hbm [shape: f32[16,32], index: 6, kind: output, shape index: {}]
  %s7 = sld [smem:[#allocation0]]
  $region54: #{tpu_custom_call.1} parent=0
    _
  %s9 = ssub.s32 1, %s7
  %s10 = scalar_select 0, %s9, %s7
  $region1: #{tpu_custom_call.1} parent=0
    #allocation3 [shape = 'u8[8192]{0}', space=vmem, size = 0x2000, scoped, tag = 'input window, operand 1, single buffered']
    #allocation4 [shape = 's32[1]{0}', space=sflag, size = 0x4, scoped, tag = 'scoped memory for tpu_custom_call.1']
    #allocation5 [shape = 's32[1]{0}', space=sflag, size = 0x4, scoped, tag = 'scoped memory for tpu_custom_call.1']
    #allocation6 [shape = 'u8[8192]{0}', space=vmem, size = 0x2000, scoped, tag = 'input window, operand 2, single buffered']
    #allocation7 [shape = 's32[1]{0}', space=sflag, size = 0x4, scoped, tag = 'scoped memory for tpu_custom_call.1']
    #allocation8 [shape = 'u8[16384]{0}', space=vmem, size = 0x4000, scoped, tag = 'input window, operand 4, single buffered']
    #allocation9 [shape = 'u8[8192]{0}', space=vmem, size = 0x2000, scoped, tag = 'output window, operand 0, single buffered']
    %11 = vsyncpa [#allocation4], 0
    %12 = vsyncpa [#allocation7], 0
    %13 = vsyncpa [#allocation5], 0
    // Predicated region
    $region2: #{tpu_custom_call.1} parent=1 // pred_check
      _
    $region3: #{tpu_custom_call.1} parent=1 // pred_check_branch
      %15 = sbr.rel (0) target = $region5
    $region4: #{tpu_custom_call.1} parent=1 // pred_region
      _
    $region5: #{tpu_custom_call.1} parent=1 // pred_fallthru
      _
    // Predicated region
    $region6: #{tpu_custom_call.1} parent=1 // pred_check
      _
    $region7: #{tpu_custom_call.1} parent=1 // pred_check_branch
      %17 = sbr.rel (0) target = $region9
    $region8: #{tpu_custom_call.1} parent=1 // pred_region
      %19 = vsyncadd [#allocation4], 0
      %s20 = sshll.u32 %s1, 4
      %s21 = int_to_ptr.hbm [resolvable:$true] %s20
      %s22 = sshll.u32 [#allocation3], 4
      %s23 = int_to_ptr.vmem [resolvable:$true] %s22
      %28 = dma.hbm_to_vmem [thread:$0]  %s21, 256, %s23, [#allocation4], 128, 128, 8
    $region9: #{tpu_custom_call.1} parent=1 // pred_fallthru
      _
    // Predicated region
    $region10: #{tpu_custom_call.1} parent=1 // pred_check
      _
    $region11: #{tpu_custom_call.1} parent=1 // pred_check_branch
      %30 = sbr.rel (0) target = $region13
    $region12: #{tpu_custom_call.1} parent=1 // pred_region
      %32 = vsyncadd [#allocation7], 0
      %s33 = sshll.u32 %s2, 4
      %s34 = int_to_ptr.hbm [resolvable:$true] %s33
      %s35 = sshll.u32 [#allocation6], 4
      %s36 = int_to_ptr.vmem [resolvable:$true] %s35
      %41 = dma.hbm_to_vmem [thread:$0]  %s34, 256, %s36, [#allocation7], 128, 128, 8
    $region13: #{tpu_custom_call.1} parent=1 // pred_fallthru
      _
    // Predicated region
    $region14: #{tpu_custom_call.1} parent=1 // pred_check
      _
    $region15: #{tpu_custom_call.1} parent=1 // pred_check_branch
      %43 = sbr.rel (0) target = $region17
    $region16: #{tpu_custom_call.1} parent=1 // pred_region
      _
    $region17: #{tpu_custom_call.1} parent=1 // pred_fallthru
      _
    // Predicated region
    $region18: #{tpu_custom_call.1} parent=1 // pred_check
      _
    $region19: #{tpu_custom_call.1} parent=1 // pred_check_branch
      %45 = sbr.rel (0) target = $region21
    $region20: #{tpu_custom_call.1} parent=1 // pred_region
      %47 = vsyncadd [#allocation7], 0
      %s48 = sshll.u32 %s4, 4
      %s49 = int_to_ptr.hbm [resolvable:$true] %s48
      %s50 = sshll.u32 [#allocation8], 4
      %s51 = int_to_ptr.vmem [resolvable:$true] %s50
      %56 = dma.hbm_to_vmem [thread:$0]  %s49, 512, %s51, [#allocation7], 128, 128, 8
    $region21: #{tpu_custom_call.1} parent=1 // pred_fallthru
      _
    // Predicated region
    $region22: #{tpu_custom_call.1} parent=1 // pred_check
      _
    $region23: #{tpu_custom_call.1} parent=1 // pred_check_branch
      %58 = sbr.rel (0) target = $region25
    $region24: #{tpu_custom_call.1} parent=1 // pred_region
      _
    $region25: #{tpu_custom_call.1} parent=1 // pred_fallthru
      _
    // Predicated region
    $region26: #{tpu_custom_call.1} parent=1 // pred_check
      _
    $region27: #{tpu_custom_call.1} parent=1 // pred_check_branch
      %60 = sbr.rel (0) target = $region29
    $region28: #{tpu_custom_call.1} parent=1 // pred_region
      %62 = dma.done [#allocation4], 256
    $region29: #{tpu_custom_call.1} parent=1 // pred_fallthru
      _
    // Predicated region
    $region30: #{tpu_custom_call.1} parent=1 // pred_check
      _
    $region31: #{tpu_custom_call.1} parent=1 // pred_check_branch
      %64 = sbr.rel (0) target = $region33
    $region32: #{tpu_custom_call.1} parent=1 // pred_region
      %66 = dma.done [#allocation7], 256
    $region33: #{tpu_custom_call.1} parent=1 // pred_fallthru
      _
    // Predicated region
    $region34: #{tpu_custom_call.1} parent=1 // pred_check
      _
    $region35: #{tpu_custom_call.1} parent=1 // pred_check_branch
      %68 = sbr.rel (0) target = $region37
    $region36: #{tpu_custom_call.1} parent=1 // pred_region
      %70 = dma.done [#allocation7], 512
    $region37: #{tpu_custom_call.1} parent=1 // pred_fallthru
      _
    %p71 = scmp.eq.s32.totalorder 0, 0
    // Predicated region
    $region38: #{tpu_custom_call.1} parent=1 // pred_check
      %p72 = pneg %p71
    $region39: #{tpu_custom_call.1} parent=1 // pred_check_branch
      %74 = sbr.rel (%p72) target = $region41
    $region40: #{tpu_custom_call.1} parent=1 // pred_region
      %vm75 = vcmask 261120
      %76 = vst.msk [vmem:[#allocation2] sm:$0xff] %vm75, 0.0
      %77 = vst.msk [vmem:[#allocation2 + $0x8] sm:$0xff] %vm75, 0.0
    $region41: #{tpu_custom_call.1} parent=1 // pred_fallthru
      _
    %v78 = vld [vmem:[#allocation2] sm:$0xff]
    %v79 = vld [vmem:[#allocation2 + $0x8] sm:$0xff]
    %v80 = vld [vmem:[%s0] sm:$0xff]
    %v81 = vld [vmem:[%s0 + $0x8] sm:$0xff]
    %v82 = vld [vmem:[#allocation3] sm:$0xff]
    %v83 = vld [vmem:[#allocation3 + $0x8] sm:$0xff]
    %vm84 = vcmask 130048
    %v86 = vsel %vm84, %v80, 0
    %v89 = vsel %vm84, %v81, 0
    %91 = vmatpush.msra.mxu0 0.0
    %92 = vmatpush.msra.mxu0 0.0
    %93 = vmatpush.msra.mxu0 0.0
    %94 = vmatpush.msra.mxu0 0.0
    %95 = vmatpush.msra.mxu0 0.0
    %96 = vmatpush.msra.mxu0 0.0
    %97 = vmatpush.msra.mxu0 0.0
    %98 = vmatpush.msra.mxu0 0.0
    %99 = vmatpush.msra.mxu0 0.0
    %100 = vmatpush.msra.mxu0 0.0
    %101 = vmatpush.msra.mxu0 0.0
    %102 = vmatpush.msra.mxu0 0.0
    %103 = vmatpush.msra.mxu0 0.0
    %104 = vmatpush.msra.mxu0 0.0
    %105 = vmatpush.msra.mxu0 %v83
    %106 = vmatpush.msra.mxu0 %v82
    %107 = vmatmul.f32.gmra.mxu0 %v86
    %v108 = vpop.f32.mrf.mxu0
    %v109 = vadd.f32 0.0, %v108
    %110 = vmatmul.f32.gmra.mxu0 %v89
    %v111 = vpop.f32.mrf.mxu0
    %v112 = vadd.f32 0.0, %v111
    %113 = vdwg.mxu0
    %v114 = vadd.f32 %v78, %v109
    %v115 = vadd.f32 %v79, %v112
    %vm116 = vcmask 261120
    %117 = vst.msk [vmem:[#allocation2] sm:$0xff] %vm116, %v114
    %118 = vst.msk [vmem:[#allocation2 + $0x8] sm:$0xff] %vm116, %v115
    // Predicated region
    $region42: #{tpu_custom_call.1} parent=1 // pred_check
      %p119 = pneg %p71
    $region43: #{tpu_custom_call.1} parent=1 // pred_check_branch
      %121 = sbr.rel (%p119) target = $region45
    $region44: #{tpu_custom_call.1} parent=1 // pred_region
      %v122 = vld [vmem:[#allocation2] sm:$0xff]
      %v123 = vld [vmem:[#allocation2 + $0x8] sm:$0xff]
      %v124 = vld [vmem:[#allocation6] sm:$0xff]
      %v125 = vld [vmem:[#allocation6 + $0x8] sm:$0xff]
      %v126 = vadd.f32 %v122, %v124
      %v127 = vadd.f32 %v123, %v125
      %v128 = vld [vmem:[%s3] sm:$0xff]
      %v129 = vld [vmem:[%s3 + $0x8] sm:$0xff]
      %131 = vset.pattern.permute.xlu0 0
      %132 = vperm.xlu0 %131, %v128
      %v133 = vpop.permute.xlu0 %132
      %136 = vset.pattern.permute.xlu0 0
      %137 = vperm.xlu0 %136, %v129
      %v138 = vpop.permute.xlu0 %137
      %v140 = vmul.f32 %v126, %v133
      %v141 = vmul.f32 %v127, %v138
      %v142 = vld [vmem:[#allocation8] sm:$0xff]
      %v143 = vld [vmem:[#allocation8 + $0x8] sm:$0xff]
      %v144 = vld [vmem:[#allocation8 + $0x10] sm:$0xff]
      %v145 = vld [vmem:[#allocation8 + $0x18] sm:$0xff]
      %v146 = vld [vmem:[%s5] sm:$0x1]
      %v148 = vperm.slane %v146, 0
      %v151 = vsel %vm116, %v140, 0
      %v154 = vsel %vm116, %v141, 0
      %156 = vmatpush.msra.mxu0 0.0
      %157 = vmatpush.msra.mxu0 0.0
      %158 = vmatpush.msra.mxu0 0.0
      %159 = vmatpush.msra.mxu0 0.0
      %160 = vmatpush.msra.mxu0 0.0
      %161 = vmatpush.msra.mxu0 0.0
      %162 = vmatpush.msra.mxu0 0.0
      %163 = vmatpush.msra.mxu0 0.0
      %164 = vmatpush.msra.mxu0 0.0
      %165 = vmatpush.msra.mxu0 0.0
      %166 = vmatpush.msra.mxu0 0.0
      %167 = vmatpush.msra.mxu0 0.0
      %168 = vmatpush.msra.mxu0 %v145
      %169 = vmatpush.msra.mxu0 %v144
      %170 = vmatpush.msra.mxu0 %v143
      %171 = vmatpush.msra.mxu0 %v142
      %172 = vmatmul.f32.gmra.mxu0 %v151
      %v173 = vpop.f32.mrf.mxu0
      %v174 = vadd.f32 %v148, %v173
      %175 = vmatmul.f32.gmra.mxu0 %v154
      %v176 = vpop.f32.mrf.mxu0
      %v177 = vadd.f32 %v148, %v176
      %178 = vdwg.mxu0
      %v179 = vmax.f32 %v174, 0.0
      %v180 = vmax.f32 %v177, 0.0
      %181 = vst.msk [vmem:[#allocation9] sm:$0xff] %vm116, %v179
      %182 = vst.msk [vmem:[#allocation9 + $0x8] sm:$0xff] %vm116, %v180
    $region45: #{tpu_custom_call.1} parent=1 // pred_fallthru
      _
    // Predicated region
    $region46: #{tpu_custom_call.1} parent=1 // pred_check
      _
    $region47: #{tpu_custom_call.1} parent=1 // pred_check_branch
      %184 = sbr.rel (0) target = $region49
    $region48: #{tpu_custom_call.1} parent=1 // pred_region
      %186 = vsyncadd [#allocation5], 0
      %s187 = sshll.u32 [#allocation9], 4
      %s188 = int_to_ptr.vmem [resolvable:$true] %s187
      %s189 = sshll.u32 %s6, 4
      %s190 = int_to_ptr.hbm [resolvable:$true] %s189
      %195 = dma.vmem_to_hbm [thread:$0]  %s188, 256, %s190, [#allocation5], 128, 128, 8
    $region49: #{tpu_custom_call.1} parent=1 // pred_fallthru
      _
    // Predicated region
    $region50: #{tpu_custom_call.1} parent=1 // pred_check
      _
    $region51: #{tpu_custom_call.1} parent=1 // pred_check_branch
      %197 = sbr.rel (0) target = $region53
    $region52: #{tpu_custom_call.1} parent=1 // pred_region
      %199 = dma.done [#allocation5], 256
    $region53: #{tpu_custom_call.1} parent=1 // pred_fallthru
      _
    %200 = vsyncpa [#allocation4], 1
    %201 = vsyncpa [#allocation7], 1
    %202 = vsyncpa [#allocation5], 1

</llo_original>
